<compile_context>
chip_gen: v5e
topology: v5e:2x2
jax: 0.10.0
libtpu: 0.0.40
codegen_flags: <defaults>
</compile_context>

<pallas_src>
import jax
import jax.numpy as jnp
from jax.experimental import pallas as pl
from jax.experimental.pallas import tpu as pltpu


def _concept_kernel(x_ref, w_ref, b_ref, l_ref, o_ref):
    # x_ref: (tb, H)  w_ref: (H, C)  b_ref: (1, C)  l_ref: (tb, C)  o_ref: (1, tb)
    logits = (
        jnp.dot(x_ref[...], w_ref[...], preferred_element_type=jnp.float32)
        + b_ref[...]
    )
    # sigmoid(x) = 1 / (1 + exp(-x)); exp and the approximate reciprocal both run
    # on the EUP slot, leaving the VPU free.
    probs = pl.reciprocal(1.0 + jnp.exp(-logits), approx=True)
    weighted = probs * l_ref[...]                               # (tb, C)
    # Row-sum over C *and* relayout (batch -> lanes) in one MXU op:
    #   (1, C) @ (tb, C)^T -> (1, tb), stored as a lane-dense row.
    ones_row = jnp.ones((1, weighted.shape[1]), jnp.float32)
    o_ref[...] = jax.lax.dot_general(
        ones_row, weighted,
        dimension_numbers=(((1,), (1,)), ((), ())),
        preferred_element_type=jnp.float32,
    )


def _pick_batch_tile(B, H, C):
    # Largest tile that (a) divides B, (b) keeps the double-buffered per-step
    # working set comfortably inside v7x's 64 MiB VMEM.
    budget = 24 << 20  # bytes for 2 x (x tile + l tile + out tile)
    tb = min(B, 1024)
    while B % tb != 0:
        tb //= 2
    while tb > 128 and 2 * tb * (H + C + 1) * 4 > budget and B % (tb // 2) == 0:
        tb //= 2
    return max(tb, 1)


def concept_logits_to_predicate(x, w, b, l, *, tb=None):
    """x:[B,H] f32, w:[H,C] f32, b:[C] f32, l:[B,C] f32 -> [B] f32."""
    B, H = x.shape
    C = w.shape[1]
    if tb is None:
        tb = _pick_batch_tile(B, H, C)
    assert B % tb == 0, "batch must be divisible by the batch tile"
    b2 = b.reshape(1, C)

    # VMEM: double-buffered x/l/out tiles + resident weight & bias (+ headroom).
    need = 2 * (tb * H + tb * C + tb) * 4 + 2 * (H * C + C) * 4
    vmem_limit = min(max(2 * need + (8 << 20), 32 << 20), 100 << 20)

    out = pl.pallas_call(
        _concept_kernel,
        out_shape=jax.ShapeDtypeStruct((1, B), jnp.float32),
        grid_spec=pl.GridSpec(
            grid=(B // tb,),
            in_specs=[
                pl.BlockSpec((tb, H), lambda i: (i, 0)),   # x tile over batch
                pl.BlockSpec((H, C), lambda i: (0, 0)),    # full weight (resident)
                pl.BlockSpec((1, C), lambda i: (0, 0)),    # full bias (resident)
                pl.BlockSpec((tb, C), lambda i: (i, 0)),   # l tile over batch
            ],
            out_specs=pl.BlockSpec((1, tb), lambda i: (0, i)),  # lane-dense rows
        ),
        compiler_params=pltpu.CompilerParams(
            dimension_semantics=("parallel",),   # batch axis can shard across TCs (v7x)
            vmem_limit_bytes=vmem_limit,
        ),
    )(x, w, b2, l)
    return out.reshape(B)


def _reference(x, w, b, l):
    logits = x @ w + b
    probs = jax.nn.sigmoid(logits)
    return jnp.sum(probs * l, axis=1)


def _make_inputs(key, B, H, C):
    kx, kw, kb, kl = jax.random.split(key, 4)
    x = jax.random.normal(kx, (B, H), dtype=jnp.float32)
    w = jax.random.normal(kw, (H, C), dtype=jnp.float32) * 0.1
    b = jax.random.normal(kb, (C,), dtype=jnp.float32) * 0.1
    # l: one-hot concept selectors (as in LTN predicate grounding).
    labels = jax.random.randint(kl, (B,), 0, C)
    l = jax.nn.one_hot(labels, C, dtype=jnp.float32)
    return x, w, b, l


if __name__ == "__main__":
    # Small shape matching the module: batch=8, hidden=32, concept classes=16.
    B, H, C = 8, 32, 16
    x, w, b, l = _make_inputs(jax.random.PRNGKey(0), B, H, C)
    out = jax.block_until_ready(concept_logits_to_predicate(x, w, b, l))
    ref = _reference(x, w, b, l)
    assert out.shape == (B,)
    # approx reciprocal (EUP) -> loosen tolerance vs. exact-sigmoid reference.
    assert jnp.allclose(out, ref, atol=5e-3, rtol=5e-3)

    # Exercise the tiled multi-step path (grid > 1, lane-dense 128-wide tiles).
    B2 = 512
    x2, w2, b2, l2 = _make_inputs(jax.random.PRNGKey(1), B2, H, C)
    out2 = jax.block_until_ready(
        concept_logits_to_predicate(x2, w2, b2, l2, tb=128)
    )
    ref2 = _reference(x2, w2, b2, l2)
    assert out2.shape == (B2,)
    assert jnp.allclose(out2, ref2, atol=5e-3, rtol=5e-3)

    print("KERNEL_OK")
</pallas_src>

<mosaic_0001>
module attributes {stable_mosaic.version = 11 : i64} {
  func.func @_concept_kernel(%arg0: i32, %arg1: memref<8x32xf32, #tpu.memory_space<vmem>>, %arg2: memref<32x16xf32, #tpu.memory_space<vmem>>, %arg3: memref<1x16xf32, #tpu.memory_space<vmem>>, %arg4: memref<8x16xf32, #tpu.memory_space<vmem>>, %arg5: memref<1x8xf32, #tpu.memory_space<vmem>>) attributes {dimension_semantics = [#tpu.dimension_semantics<parallel>], iteration_bounds = array<i64: 1>, scalar_prefetch = 0 : i64, scratch_operands = 0 : i64, tpu.core_type = #tpu.core_type<tc>, window_params = [{transform_indices = @transform_0, window_bounds = array<i64: 8, 32>}, {pipeline_mode = #tpu.pipeline_mode<synchronous>, transform_indices = @transform_1, window_bounds = array<i64: 32, 16>}, {pipeline_mode = #tpu.pipeline_mode<synchronous>, transform_indices = @transform_2, window_bounds = array<i64: 1, 16>}, {transform_indices = @transform_3, window_bounds = array<i64: 8, 16>}, {transform_indices = @transform_4, window_bounds = array<i64: 1, 8>}]} {
    %c0 = arith.constant 0 : index
    %c0_0 = arith.constant 0 : index
    %0 = vector.load %arg1[%c0, %c0_0] : memref<8x32xf32, #tpu.memory_space<vmem>>, vector<8x32xf32>
    %c0_1 = arith.constant 0 : index
    %c0_2 = arith.constant 0 : index
    %1 = vector.load %arg2[%c0_1, %c0_2] : memref<32x16xf32, #tpu.memory_space<vmem>>, vector<32x16xf32>
    %cst = arith.constant dense<0.000000e+00> : vector<8x16xf32>
    %2 = tpu.matmul %0, %1, %cst {dimension_numbers = #tpu.dot_dimension_numbers<[1], [0], [0], [1], [0, 0, 1, 1], [], []>} : vector<8x32xf32>, vector<32x16xf32>, vector<8x16xf32> -> vector<8x16xf32>
    %c0_3 = arith.constant 0 : index
    %c0_4 = arith.constant 0 : index
    %3 = vector.load %arg3[%c0_3, %c0_4] : memref<1x16xf32, #tpu.memory_space<vmem>>, vector<1x16xf32>
    %4 = vector.broadcast %3 : vector<1x16xf32> to vector<8x16xf32>
    %5 = arith.addf %2, %4 : vector<8x16xf32>
    %cst_5 = arith.constant 0.000000e+00 : f32
    %6 = vector.broadcast %cst_5 : f32 to vector<8x16xf32>
    %7 = arith.subf %6, %5 : vector<8x16xf32>
    %8 = math.exp %7 : vector<8x16xf32>
    %cst_6 = arith.constant 1.000000e+00 : f32
    %9 = vector.broadcast %cst_6 : f32 to vector<8x16xf32>
    %10 = arith.addf %9, %8 : vector<8x16xf32>
    %11 = tpu.reciprocal %10 {approx = true} : vector<8x16xf32> -> vector<8x16xf32>
    %c0_7 = arith.constant 0 : index
    %c0_8 = arith.constant 0 : index
    %12 = vector.load %arg4[%c0_7, %c0_8] : memref<8x16xf32, #tpu.memory_space<vmem>>, vector<8x16xf32>
    %13 = arith.mulf %11, %12 : vector<8x16xf32>
    %cst_9 = arith.constant 1.000000e+00 : f32
    %14 = vector.broadcast %cst_9 : f32 to vector<1x16xf32>
    %cst_10 = arith.constant dense<0.000000e+00> : vector<1x8xf32>
    %15 = tpu.matmul %14, %13, %cst_10 {dimension_numbers = #tpu.dot_dimension_numbers<[1], [1], [0], [0], [0, 0, 1, 0], [], []>} : vector<1x16xf32>, vector<8x16xf32>, vector<1x8xf32> -> vector<1x8xf32>
    %c0_11 = arith.constant 0 : index
    %c0_12 = arith.constant 0 : index
    %16 = vector.load %arg5[%c0_11, %c0_12] : memref<1x8xf32, #tpu.memory_space<vmem>>, vector<1x8xf32>
    tpu.vector_store %arg5[%c0_11, %c0_12], %15 {strides = array<i32>} : memref<1x8xf32, #tpu.memory_space<vmem>>, vector<1x8xf32>,
    return
  }
  func.func @transform_0(%arg0: i32) -> (i32, i32) {
    %c0_i32 = arith.constant 0 : i32
    %c0_i32_0 = arith.constant 0 : i32
    return %arg0, %c0_i32 : i32, i32
  }
  func.func @transform_1(%arg0: i32) -> (i32, i32) {
    %c0_i32 = arith.constant 0 : i32
    %c0_i32_0 = arith.constant 0 : i32
    %c0_i32_1 = arith.constant 0 : i32
    return %c0_i32, %c0_i32_0 : i32, i32
  }
  func.func @transform_2(%arg0: i32) -> (i32, i32) {
    %c0_i32 = arith.constant 0 : i32
    %c0_i32_0 = arith.constant 0 : i32
    %c0_i32_1 = arith.constant 0 : i32
    return %c0_i32, %c0_i32_0 : i32, i32
  }
  func.func @transform_3(%arg0: i32) -> (i32, i32) {
    %c0_i32 = arith.constant 0 : i32
    %c0_i32_0 = arith.constant 0 : i32
    return %arg0, %c0_i32 : i32, i32
  }
  func.func @transform_4(%arg0: i32) -> (i32, i32) {
    %c0_i32 = arith.constant 0 : i32
    %c0_i32_0 = arith.constant 0 : i32
    return %c0_i32, %arg0 : i32, i32
  }
}

</mosaic_0001>

<llo_original>
// kernel: tpu_custom_call.1
$region0: #{tpu_custom_call.1}
  #allocation0 [shape = 'u32[]', space=smem, size = 0x4, offset = 0x4, fixed_abs, tag = 'smem constant byte address 0x4 - core index']
  #allocation1 [shape = 'u32[72,128]{1,0:T(1,128)}', space=vmem, size = 0x9000, scoped, tag = 'internal scratch']
  %s0 = inlined_call_operand.vmem [shape: f32[8,32], index: 0, kind: input, shape index: {}]
  %s1 = inlined_call_operand.vmem [shape: f32[32,16], index: 1, kind: input, shape index: {}]
  %s2 = inlined_call_operand.vmem [shape: f32[1,16], index: 2, kind: input, shape index: {}]
  %s3 = inlined_call_operand.vmem [shape: f32[8,16], index: 3, kind: input, shape index: {}]
  %s4 = inlined_call_operand.hbm [shape: f32[1,8], index: 4, kind: output, shape index: {}]
  %s5 = sld [smem:[#allocation0]]
  $region26: #{tpu_custom_call.1} parent=0
    _
  %s7 = ssub.s32 1, %s5
  %s8 = scalar_select 0, %s7, %s5
  $region1: #{tpu_custom_call.1} parent=0
    #allocation2 [shape = 'u8[512]{0}', space=vmem, size = 0x400, scoped, tag = 'output window, operand 0, single buffered']
    #allocation3 [shape = 's32[1]{0}', space=sflag, size = 0x4, scoped, tag = 'scoped memory for tpu_custom_call.1']
    %9 = vsyncpa [#allocation3], 0
    // Predicated region
    $region2: #{tpu_custom_call.1} parent=1 // pred_check
      _
    $region3: #{tpu_custom_call.1} parent=1 // pred_check_branch
      %11 = sbr.rel (0) target = $region5
    $region4: #{tpu_custom_call.1} parent=1 // pred_region
      _
    $region5: #{tpu_custom_call.1} parent=1 // pred_fallthru
      _
    // Predicated region
    $region6: #{tpu_custom_call.1} parent=1 // pred_check
      _
    $region7: #{tpu_custom_call.1} parent=1 // pred_check_branch
      %13 = sbr.rel (0) target = $region9
    $region8: #{tpu_custom_call.1} parent=1 // pred_region
      _
    $region9: #{tpu_custom_call.1} parent=1 // pred_fallthru
      _
    // Predicated region
    $region10: #{tpu_custom_call.1} parent=1 // pred_check
      _
    $region11: #{tpu_custom_call.1} parent=1 // pred_check_branch
      %15 = sbr.rel (0) target = $region13
    $region12: #{tpu_custom_call.1} parent=1 // pred_region
      _
    $region13: #{tpu_custom_call.1} parent=1 // pred_fallthru
      _
    // Predicated region
    $region14: #{tpu_custom_call.1} parent=1 // pred_check
      _
    $region15: #{tpu_custom_call.1} parent=1 // pred_check_branch
      %17 = sbr.rel (0) target = $region17
    $region16: #{tpu_custom_call.1} parent=1 // pred_region
      _
    $region17: #{tpu_custom_call.1} parent=1 // pred_fallthru
      _
    %v18 = vld [vmem:[%s0] sm:$0xff]
    %v19 = vld [vmem:[%s1] sm:$0xff]
    %v20 = vld [vmem:[%s1 + $0x8] sm:$0xff]
    %v21 = vld [vmem:[%s1 + $0x10] sm:$0xff]
    %v22 = vld [vmem:[%s1 + $0x18] sm:$0xff]
    %v23 = vld [vmem:[%s2] sm:$0x1]
    %v25 = vperm.slane %v23, 0
    %vm27 = vcmask 261120
    %v29 = vsel %vm27, %v18, 0
    %31 = vmatpush.msra.mxu0 0.0
    %32 = vmatpush.msra.mxu0 0.0
    %33 = vmatpush.msra.mxu0 0.0
    %34 = vmatpush.msra.mxu0 0.0
    %35 = vmatpush.msra.mxu0 0.0
    %36 = vmatpush.msra.mxu0 0.0
    %37 = vmatpush.msra.mxu0 0.0
    %38 = vmatpush.msra.mxu0 0.0
    %39 = vmatpush.msra.mxu0 0.0
    %40 = vmatpush.msra.mxu0 0.0
    %41 = vmatpush.msra.mxu0 0.0
    %42 = vmatpush.msra.mxu0 0.0
    %43 = vmatpush.msra.mxu0 %v22
    %44 = vmatpush.msra.mxu0 %v21
    %45 = vmatpush.msra.mxu0 %v20
    %46 = vmatpush.msra.mxu0 %v19
    %47 = vmatmul.f32.gmra.mxu0 %v29
    %v48 = vpop.f32.mrf.mxu0
    %v49 = vadd.f32 %v25, %v48
    %50 = vdwg.mxu0
    %v51 = vsub.f32 0.0, %v49
    %v52 = vmul.f32 %v51, 1.442695
    %v53 = vpow.pop %v52
    %v54 = vadd.f32 %v53, 1.0
    %v55 = vrcp.pop %v54
    %v56 = vld [vmem:[%s3] sm:$0xff]
    %v57 = vmul.f32 %v55, %v56
    %vm58 = vcmask 130048
    %v60 = vsel %vm58, 1.0, 0
    %v63 = vsel %vm58, %v57, 0
    %65 = vmatpush.xpose.msra.mxu0 0.0
    %66 = vmatpush.xpose.msra.mxu0 0.0
    %67 = vmatpush.xpose.msra.mxu0 0.0
    %68 = vmatpush.xpose.msra.mxu0 0.0
    %69 = vmatpush.xpose.msra.mxu0 0.0
    %70 = vmatpush.xpose.msra.mxu0 0.0
    %71 = vmatpush.xpose.msra.mxu0 0.0
    %72 = vmatpush.xpose.msra.mxu0 0.0
    %73 = vmatpush.xpose.msra.mxu0 0.0
    %74 = vmatpush.xpose.msra.mxu0 0.0
    %75 = vmatpush.xpose.msra.mxu0 0.0
    %76 = vmatpush.xpose.msra.mxu0 0.0
    %77 = vmatpush.xpose.msra.mxu0 0.0
    %78 = vmatpush.xpose.msra.mxu0 0.0
    %79 = vmatpush.xpose.msra.mxu0 0.0
    %80 = vmatpush.xpose.msra.mxu0 %v63
    %81 = vmatmul.f32.gmra.mxu0 %v60
    %v82 = vpop.f32.mrf.mxu0
    %v83 = vadd.f32 0.0, %v82
    %84 = vdwg.mxu0
    %vm85 = vcmask 57344
    %86 = vst.msk [vmem:[#allocation2] sm:$0x1] %vm85, %v83
    // Predicated region
    $region18: #{tpu_custom_call.1} parent=1 // pred_check
      _
    $region19: #{tpu_custom_call.1} parent=1 // pred_check_branch
      %88 = sbr.rel (0) target = $region21
    $region20: #{tpu_custom_call.1} parent=1 // pred_region
      %90 = vsyncadd [#allocation3], 0
      %s92 = sshll.u32 [#allocation2], 4
      %s93 = int_to_ptr.vmem [resolvable:$true] %s92
      %s94 = sshll.u32 %s4, 4
      %s95 = int_to_ptr.hbm [resolvable:$true] %s94
      %97 = dma.vmem_to_hbm [thread:$0]  %s93, 16, %s95, [#allocation3]
    $region21: #{tpu_custom_call.1} parent=1 // pred_fallthru
      _
    // Predicated region
    $region22: #{tpu_custom_call.1} parent=1 // pred_check
      _
    $region23: #{tpu_custom_call.1} parent=1 // pred_check_branch
      %99 = sbr.rel (0) target = $region25
    $region24: #{tpu_custom_call.1} parent=1 // pred_region
      %101 = dma.done [#allocation3], 16
    $region25: #{tpu_custom_call.1} parent=1 // pred_fallthru
      _
    %102 = vsyncpa [#allocation3], 1

</llo_original>
